<compile_context>
chip_gen: v6e
topology: v6e:2x2x1
jax: 0.10.0
libtpu: 0.0.40
codegen_flags: <defaults>
</compile_context>

<pallas_src>
import functools

import numpy as np

import jax
import jax.numpy as jnp
from jax.experimental import pallas as pl
from jax.experimental.pallas import tpu as pltpu


def _layernorm_kernel(x_ref, w_ref, b_ref, o_ref, *, eps, inv_n):
    """One grid step: TB batch elements, each normalized over its full slab.

    x_ref / o_ref : (TB, rows, lanes)   -- lanes is the vreg lane axis
    w_ref / b_ref : (rows, lanes)       -- grid-invariant affine parameters
    """
    x = x_ref[...].astype(jnp.float32)

    def _sum_slab(v):  # per-batch reduction over the (rows, lanes) slab
        return jnp.sum(jnp.sum(v, axis=2, keepdims=True), axis=1, keepdims=True)

    # Two-pass statistics: mean first, then centered sum of squares (robust
    # against the E[x^2] - mean^2 cancellation for non-zero-mean inputs).
    mean = _sum_slab(x) * inv_n                    # (TB, 1, 1)
    xc = x - mean
    var = _sum_slab(xc * xc) * inv_n               # biased variance, (TB, 1, 1)
    inv = jax.lax.rsqrt(var + eps)                 # EUP slot

    w = w_ref[...].astype(jnp.float32)[None, :, :]
    b = b_ref[...].astype(jnp.float32)[None, :, :]
    o_ref[...] = (xc * inv * w + b).astype(o_ref.dtype)


def _fold_cnt(cnt):
    """Pick (rows, lanes) with rows * lanes == cnt maximizing vreg density."""
    divs, d = set(), 1
    while d * d <= cnt:
        if cnt % d == 0:
            divs.add(d)
            divs.add(cnt // d)
        d += 1
    best, best_score = (1, cnt), -1.0
    for lanes in sorted(divs):
        rows = cnt // lanes
        lane_eff = lanes / (128.0 * ((lanes + 127) // 128))
        sub_eff = rows / (8.0 * ((rows + 7) // 8))
        score = lane_eff * sub_eff * (1.05 if lanes % 128 == 0 else 1.0)
        if score > best_score:
            best, best_score = (rows, lanes), score
    return best


def _vmem_capacity_bytes():
    try:
        cap = getattr(pltpu.get_tpu_info(), "vmem_capacity_bytes", None)
        if cap:
            return int(cap)
    except Exception:
        pass
    return 64 << 20  # conservative: v7x per-TensorCore VMEM


def _identity_idx(idx, num_nodes, num_nodes_total):
    """True iff the idx gather is statically known to be a no-op."""
    if idx is None:
        return True
    if num_nodes != num_nodes_total:
        return False
    try:
        idx_np = np.asarray(idx)  # raises for traced/abstract values
    except Exception:
        return False
    return idx_np.shape == (num_nodes_total,) and bool(
        np.array_equal(idx_np, np.arange(num_nodes_total)))


def layer_normalization(x, weight, bias, idx=None, eps=1e-5):
    """Pallas implementation of LayerNormalization.forward.

    Args:
      x:      (B, C, N, T) float
      weight: (C, N_total, T) float
      bias:   (C, N_total, T) float
      idx:    (N,) int node indices (or None for the identity gather)
    Returns:
      (B, C, N, T), same dtype as x.
    """
    B, C, N, T = x.shape
    cnt = C * N * T

    if _identity_idx(idx, N, weight.shape[1]):
        # No HBM round-trip for the affine parameters.
        w_sel, b_sel = weight, bias
    else:
        # TODO(synk): fuse this gather into the kernel (scalar-prefetch idx in
        # SMEM + per-node DMA from HBM weight/bias); kept in the wrapper because
        # the gather reorders seq_len-sized chunks across the lane-dense folding
        # below.  If idx is static across steps, hoist this out of the step fn.
        w_sel = jnp.take(weight, idx, axis=1)
        b_sel = jnp.take(bias, idx, axis=1)

    rows, lanes = _fold_cnt(cnt)
    x3 = x.reshape(B, rows, lanes)
    w2 = w_sel.astype(jnp.float32).reshape(rows, lanes)
    b2 = b_sel.astype(jnp.float32).reshape(rows, lanes)

    x_bytes = cnt * x.dtype.itemsize          # one per-batch slab of x / out
    wb_bytes = cnt * 4                        # one f32 weight or bias slab

    # Per-generation VMEM budget (v5e/v6e: 128 MiB, v7x: 64 MiB per TC); keep
    # ~25% headroom for compiler / internal scratch.
    budget = min(int(_vmem_capacity_bytes() * 3 // 4), 96 << 20)
    fixed = 2 * wb_bytes                      # weight + bias, single-buffered
    per_b = 4 * x_bytes                       # x (2 buffers) + out (2 buffers)
    headroom = 4 << 20

    # Batch elements per grid step: amortize per-step overhead and make DMAs
    # large enough (~2 MiB) to approach HBM roofline, within the VMEM budget.
    tb_cap = max((budget - fixed - headroom) // per_b, 1)
    tb_target = max((2 << 20) // max(x_bytes, 1), 1)
    TB = int(max(min(B, tb_cap, tb_target), 1))
    grid_b = -(-B // TB)   # ceil-div; a partial last block is edge-handled
    # TODO(synk): slabs too large to double-buffer even at TB == 1 (and B == 1
    # on v7x, which leaves one TensorCore idle) need a rows-tiled two-pass
    # partial-sum reduction over a second grid axis; not implemented here.

    needed = fixed + per_b * TB + headroom
    # v6e-style deeper pipelining on x when there are many tiny steps.
    x_buffers = 2
    if grid_b >= 4 and TB * x_bytes <= (2 << 20) and needed + TB * x_bytes <= budget:
        x_buffers = 3
        needed += TB * x_bytes
    vmem_limit = int(min(max(needed, 32 << 20), budget))

    kernel = functools.partial(_layernorm_kernel, eps=eps, inv_n=1.0 / cnt)

    if x_buffers == 2:
        x_spec = pl.BlockSpec((TB, rows, lanes), lambda b: (b, 0, 0))
    else:
        x_spec = pl.BlockSpec((TB, rows, lanes), lambda b: (b, 0, 0),
                              pipeline_mode=pl.Buffered(x_buffers))

    cost = pl.CostEstimate(
        flops=8 * B * cnt,
        transcendentals=B,
        bytes_accessed=2 * B * x_bytes + 2 * wb_bytes,
    )

    out3 = pl.pallas_call(
        kernel,
        out_shape=jax.ShapeDtypeStruct((B, rows, lanes), x.dtype),
        grid=(grid_b,),
        in_specs=[
            x_spec,
            # weight / bias are grid-invariant: a single VMEM buffer suffices.
            pl.BlockSpec((rows, lanes), lambda b: (0, 0),
                         pipeline_mode=pl.Buffered(1)),
            pl.BlockSpec((rows, lanes), lambda b: (0, 0),
                         pipeline_mode=pl.Buffered(1)),
        ],
        out_specs=pl.BlockSpec((TB, rows, lanes), lambda b: (b, 0, 0)),
        compiler_params=pltpu.CompilerParams(
            dimension_semantics=("parallel",),
            vmem_limit_bytes=vmem_limit,
        ),
        cost_estimate=cost,
        # input_output_aliases={0: 0} would drop one HBM buffer but only if the
        # caller no longer needs x; intentionally not enabled here.
    )(x3, w2, b2)

    return out3.reshape(B, C, N, T)


def _reference(x, weight, bias, idx, eps=1e-5):
    # Pure-JAX reference mirroring F.layer_norm over X.shape[1:].
    w_sel = jnp.take(weight, idx, axis=1)
    b_sel = jnp.take(bias, idx, axis=1)
    axes = (1, 2, 3)
    mean = jnp.mean(x, axis=axes, keepdims=True)
    var = jnp.mean((x - mean) ** 2, axis=axes, keepdims=True)
    y = (x - mean) * jax.lax.rsqrt(var + eps)
    return y * w_sel[None] + b_sel[None]


if __name__ == "__main__":
    # Shapes consistent with the module: (batch, feature_dim, num_nodes, seq_len)
    B, C, N, T = 2, 4, 16, 8
    N_TOTAL = 20                      # total nodes in the parameter tables
    eps = 1e-5

    key = jax.random.PRNGKey(0)
    kx, kw, kb, ki = jax.random.split(key, 4)

    # Non-zero-mean input to exercise the two-pass variance path.
    x = 3.0 + jax.random.normal(kx, (B, C, N, T), dtype=jnp.float32)

    # Module init is ones/zeros; use deterministic random affine params so the
    # affine + idx-gather path is actually exercised.
    weight = 1.0 + 0.1 * jax.random.normal(kw, (C, N_TOTAL, T), dtype=jnp.float32)
    bias = 0.1 * jax.random.normal(kb, (C, N_TOTAL, T), dtype=jnp.float32)

    # Path 1: dynamic node-subset gather (training-style idx).
    idx = jax.random.permutation(ki, N_TOTAL)[:N].astype(jnp.int32)
    out = jax.block_until_ready(layer_normalization(x, weight, bias, idx, eps=eps))
    ref = _reference(x, weight, bias, idx, eps=eps)
    assert out.shape == (B, C, N, T)
    assert jnp.allclose(out, ref, atol=2e-5, rtol=2e-5), "mismatch (gather path)"

    # Path 2: identity idx (eval-style) -> the wrapper gather is skipped.
    w_id, b_id = weight[:, :N, :], bias[:, :N, :]
    out2 = jax.block_until_ready(layer_normalization(x, w_id, b_id, idx=None, eps=eps))
    ref2 = _reference(x, w_id, b_id, jnp.arange(N, dtype=jnp.int32), eps=eps)
    assert jnp.allclose(out2, ref2, atol=2e-5, rtol=2e-5), "mismatch (identity path)"

    print("KERNEL_OK")
</pallas_src>

<mosaic_0001>
module attributes {stable_mosaic.version = 11 : i64} {
  func.func @_layernorm_kernel(%arg0: i32, %arg1: memref<2x4x128xf32, #tpu.memory_space<vmem>>, %arg2: memref<4x128xf32, #tpu.memory_space<vmem>>, %arg3: memref<4x128xf32, #tpu.memory_space<vmem>>, %arg4: memref<2x4x128xf32, #tpu.memory_space<vmem>>) attributes {dimension_semantics = [#tpu.dimension_semantics<parallel>], iteration_bounds = array<i64: 1>, scalar_prefetch = 0 : i64, scratch_operands = 0 : i64, tpu.core_type = #tpu.core_type<tc>, window_params = [{transform_indices = @transform_0, window_bounds = array<i64: 2, 4, 128>}, {pipeline_mode = #tpu.pipeline_mode<synchronous>, transform_indices = @transform_1, window_bounds = array<i64: 4, 128>}, {pipeline_mode = #tpu.pipeline_mode<synchronous>, transform_indices = @transform_2, window_bounds = array<i64: 4, 128>}, {transform_indices = @transform_3, window_bounds = array<i64: 2, 4, 128>}]} {
    %c0 = arith.constant 0 : index
    %c0_0 = arith.constant 0 : index
    %c0_1 = arith.constant 0 : index
    %0 = vector.load %arg1[%c0, %c0_0, %c0_1] : memref<2x4x128xf32, #tpu.memory_space<vmem>>, vector<2x4x128xf32>
    %cst = arith.constant dense<0.000000e+00> : vector<2x4xf32>
    %1 = vector.multi_reduction <add>, %0, %cst [2] : vector<2x4x128xf32> to vector<2x4xf32>
    %2 = vector.shape_cast %1 : vector<2x4xf32> to vector<2x4x1xf32>
    %cst_2 = arith.constant dense<0.000000e+00> : vector<2x1xf32>
    %3 = vector.multi_reduction <add>, %2, %cst_2 [1] : vector<2x4x1xf32> to vector<2x1xf32>
    %4 = vector.shape_cast %3 : vector<2x1xf32> to vector<2x1x1xf32>
    %cst_3 = arith.constant 0.001953125 : f32
    %5 = vector.broadcast %cst_3 : f32 to vector<2x1x1xf32>
    %6 = arith.mulf %4, %5 : vector<2x1x1xf32>
    %7 = vector.broadcast %6 : vector<2x1x1xf32> to vector<2x4x128xf32>
    %8 = arith.subf %0, %7 : vector<2x4x128xf32>
    %9 = arith.mulf %8, %8 : vector<2x4x128xf32>
    %cst_4 = arith.constant dense<0.000000e+00> : vector<2x4xf32>
    %10 = vector.multi_reduction <add>, %9, %cst_4 [2] : vector<2x4x128xf32> to vector<2x4xf32>
    %11 = vector.shape_cast %10 : vector<2x4xf32> to vector<2x4x1xf32>
    %cst_5 = arith.constant dense<0.000000e+00> : vector<2x1xf32>
    %12 = vector.multi_reduction <add>, %11, %cst_5 [1] : vector<2x4x1xf32> to vector<2x1xf32>
    %13 = vector.shape_cast %12 : vector<2x1xf32> to vector<2x1x1xf32>
    %cst_6 = arith.constant 0.001953125 : f32
    %14 = vector.broadcast %cst_6 : f32 to vector<2x1x1xf32>
    %15 = arith.mulf %13, %14 : vector<2x1x1xf32>
    %cst_7 = arith.constant 9.99999974E-6 : f32
    %16 = vector.broadcast %cst_7 : f32 to vector<2x1x1xf32>
    %17 = arith.addf %15, %16 : vector<2x1x1xf32>
    %18 = math.rsqrt %17 : vector<2x1x1xf32>
    %c0_8 = arith.constant 0 : index
    %c0_9 = arith.constant 0 : index
    %19 = vector.load %arg2[%c0_8, %c0_9] : memref<4x128xf32, #tpu.memory_space<vmem>>, vector<4x128xf32>
    %20 = vector.shape_cast %19 : vector<4x128xf32> to vector<1x4x128xf32>
    %c0_10 = arith.constant 0 : index
    %c0_11 = arith.constant 0 : index
    %21 = vector.load %arg3[%c0_10, %c0_11] : memref<4x128xf32, #tpu.memory_space<vmem>>, vector<4x128xf32>
    %22 = vector.shape_cast %21 : vector<4x128xf32> to vector<1x4x128xf32>
    %23 = vector.broadcast %18 : vector<2x1x1xf32> to vector<2x4x128xf32>
    %24 = arith.mulf %8, %23 : vector<2x4x128xf32>
    %25 = vector.broadcast %20 : vector<1x4x128xf32> to vector<2x4x128xf32>
    %26 = arith.mulf %24, %25 : vector<2x4x128xf32>
    %27 = vector.broadcast %22 : vector<1x4x128xf32> to vector<2x4x128xf32>
    %28 = arith.addf %26, %27 : vector<2x4x128xf32>
    %c0_12 = arith.constant 0 : index
    %c0_13 = arith.constant 0 : index
    %c0_14 = arith.constant 0 : index
    %29 = vector.load %arg4[%c0_12, %c0_13, %c0_14] : memref<2x4x128xf32, #tpu.memory_space<vmem>>, vector<2x4x128xf32>
    tpu.vector_store %arg4[%c0_12, %c0_13, %c0_14], %28 {strides = array<i32>} : memref<2x4x128xf32, #tpu.memory_space<vmem>>, vector<2x4x128xf32>,
    return
  }
  func.func @transform_0(%arg0: i32) -> (i32, i32, i32) {
    %c0_i32 = arith.constant 0 : i32
    %c0_i32_0 = arith.constant 0 : i32
    %c0_i32_1 = arith.constant 0 : i32
    return %arg0, %c0_i32, %c0_i32_0 : i32, i32, i32
  }
  func.func @transform_1(%arg0: i32) -> (i32, i32) {
    %c0_i32 = arith.constant 0 : i32
    %c0_i32_0 = arith.constant 0 : i32
    %c0_i32_1 = arith.constant 0 : i32
    return %c0_i32, %c0_i32_0 : i32, i32
  }
  func.func @transform_2(%arg0: i32) -> (i32, i32) {
    %c0_i32 = arith.constant 0 : i32
    %c0_i32_0 = arith.constant 0 : i32
    %c0_i32_1 = arith.constant 0 : i32
    return %c0_i32, %c0_i32_0 : i32, i32
  }
  func.func @transform_3(%arg0: i32) -> (i32, i32, i32) {
    %c0_i32 = arith.constant 0 : i32
    %c0_i32_0 = arith.constant 0 : i32
    %c0_i32_1 = arith.constant 0 : i32
    return %arg0, %c0_i32, %c0_i32_0 : i32, i32, i32
  }
}

</mosaic_0001>

<llo_original>
// kernel: tpu_custom_call.1
$region0: #{tpu_custom_call.1}
  #allocation0 [shape = 'u32[]', space=smem, size = 0x4, offset = 0x4, fixed_abs, tag = 'smem constant byte address 0x4 - core index']
  #allocation1 [shape = 'u32[144,128]{1,0:T(1,128)}', space=vmem, size = 0x12000, scoped, tag = 'internal scratch']
  %s0 = inlined_call_operand.hbm [shape: f32[2,4,128], index: 0, kind: input, shape index: {}]
  %s1 = inlined_call_operand.hbm [shape: f32[4,128], index: 1, kind: input, shape index: {}]
  %s2 = inlined_call_operand.hbm [shape: f32[4,128], index: 2, kind: input, shape index: {}]
  %s3 = inlined_call_operand.hbm [shape: f32[2,4,128], index: 3, kind: output, shape index: {}]
  %s4 = sld [smem:[#allocation0]]
  $region34: #{tpu_custom_call.1} parent=0
    _
  %s6 = ssub.s32 1, %s4
  %s7 = scalar_select 0, %s6, %s4
  $region1: #{tpu_custom_call.1} parent=0
    #allocation2 [shape = 'u8[4096]{0}', space=vmem, size = 0x1000, scoped, tag = 'input window, operand 0, single buffered']
    #allocation3 [shape = 's32[1]{0}', space=sflag, size = 0x4, scoped, tag = 'scoped memory for tpu_custom_call.1']
    #allocation4 [shape = 's32[1]{0}', space=sflag, size = 0x4, scoped, tag = 'scoped memory for tpu_custom_call.1']
    #allocation5 [shape = 'u8[2048]{0}', space=vmem, size = 0x800, scoped, tag = 'input window, operand 1, single buffered']
    #allocation6 [shape = 's32[1]{0}', space=sflag, size = 0x4, scoped, tag = 'scoped memory for tpu_custom_call.1']
    #allocation7 [shape = 'u8[2048]{0}', space=vmem, size = 0x800, scoped, tag = 'input window, operand 2, single buffered']
    #allocation8 [shape = 'u8[4096]{0}', space=vmem, size = 0x1000, scoped, tag = 'output window, operand 0, single buffered']
    %8 = vsyncpa [#allocation3], 0
    %9 = vsyncpa [#allocation6], 0
    %10 = vsyncpa [#allocation4], 0
    // Predicated region
    $region2: #{tpu_custom_call.1} parent=1 // pred_check
      _
    $region3: #{tpu_custom_call.1} parent=1 // pred_check_branch
      %12 = sbr.rel (0) target = $region5
    $region4: #{tpu_custom_call.1} parent=1 // pred_region
      %s14 = ssub.s32 128, 128
      %15 = vsyncadd [#allocation3], %s14
      %s16 = sshll.u32 [#allocation2], 4
      %s17 = int_to_ptr.vmem [resolvable:$true] %s16
      %22 = dma.hbm_to_vmem [thread:$0]  %s0, 128, %s17, [#allocation3], 64, 64, 4
    $region5: #{tpu_custom_call.1} parent=1 // pred_fallthru
      _
    // Predicated region
    $region6: #{tpu_custom_call.1} parent=1 // pred_check
      _
    $region7: #{tpu_custom_call.1} parent=1 // pred_check_branch
      %24 = sbr.rel (0) target = $region9
    $region8: #{tpu_custom_call.1} parent=1 // pred_region
      %s26 = ssub.s32 64, 64
      %27 = vsyncadd [#allocation6], %s26
      %s29 = sshll.u32 [#allocation5], 4
      %s30 = int_to_ptr.vmem [resolvable:$true] %s29
      %32 = dma.hbm_to_vmem [thread:$0]  %s1, 64, %s30, [#allocation6]
    $region9: #{tpu_custom_call.1} parent=1 // pred_fallthru
      _
    // Predicated region
    $region10: #{tpu_custom_call.1} parent=1 // pred_check
      _
    $region11: #{tpu_custom_call.1} parent=1 // pred_check_branch
      %34 = sbr.rel (0) target = $region13
    $region12: #{tpu_custom_call.1} parent=1 // pred_region
      %s36 = ssub.s32 64, 64
      %37 = vsyncadd [#allocation6], %s36
      %s39 = sshll.u32 [#allocation7], 4
      %s40 = int_to_ptr.vmem [resolvable:$true] %s39
      %42 = dma.hbm_to_vmem [thread:$0]  %s2, 64, %s40, [#allocation6]
    $region13: #{tpu_custom_call.1} parent=1 // pred_fallthru
      _
    // Predicated region
    $region14: #{tpu_custom_call.1} parent=1 // pred_check
      _
    $region15: #{tpu_custom_call.1} parent=1 // pred_check_branch
      %44 = sbr.rel (0) target = $region17
    $region16: #{tpu_custom_call.1} parent=1 // pred_region
      %45 = dma.done [#allocation3], 128
    $region17: #{tpu_custom_call.1} parent=1 // pred_fallthru
      _
    // Predicated region
    $region18: #{tpu_custom_call.1} parent=1 // pred_check
      _
    $region19: #{tpu_custom_call.1} parent=1 // pred_check_branch
      %47 = sbr.rel (0) target = $region21
    $region20: #{tpu_custom_call.1} parent=1 // pred_region
      %48 = dma.done [#allocation6], 64
    $region21: #{tpu_custom_call.1} parent=1 // pred_fallthru
      _
    // Predicated region
    $region22: #{tpu_custom_call.1} parent=1 // pred_check
      _
    $region23: #{tpu_custom_call.1} parent=1 // pred_check_branch
      %50 = sbr.rel (0) target = $region25
    $region24: #{tpu_custom_call.1} parent=1 // pred_region
      %51 = dma.done [#allocation6], 64
    $region25: #{tpu_custom_call.1} parent=1 // pred_fallthru
      _
    %v52 = vld [vmem:[#allocation2] sm:$0xf]
    %v53 = vld [vmem:[#allocation2 + $0x4] sm:$0xf]
    %vm54 = vcmask 1043456
    %v55 = vsel %vm54, %v52, 0.0
    %56 = vadd.xlane.f32.xlu0 %v55
    %v57 = vpop.xlane.xlu0 %56
    %v58 = vsel %vm54, %v53, 0.0
    %59 = vadd.xlane.f32.xlu0 %v58
    %v60 = vpop.xlane.xlu0 %59
    %v61 = vsel %vm54, %v57, 0.0
    %v62 = vrot.slane %v61, 4
    %v63 = vadd.f32 %v61, %v62
    %v64 = vrot.slane %v63, 2
    %v65 = vadd.f32 %v63, %v64
    %v66 = vrot.slane %v65, 1
    %v67 = vadd.f32 %v65, %v66
    %v68 = vsel %vm54, %v60, 0.0
    %v69 = vrot.slane %v68, 4
    %v70 = vadd.f32 %v68, %v69
    %v71 = vrot.slane %v70, 2
    %v72 = vadd.f32 %v70, %v71
    %v73 = vrot.slane %v72, 1
    %v74 = vadd.f32 %v72, %v73
    %v75 = vmul.f32 %v67, 0.001953125
    %v76 = vmul.f32 %v74, 0.001953125
    %v77 = vsub.f32 %v52, %v75
    %v78 = vsub.f32 %v53, %v76
    %v79 = vmul.f32 %v77, %v77
    %v80 = vmul.f32 %v78, %v78
    %v81 = vsel %vm54, %v79, 0.0
    %82 = vadd.xlane.f32.xlu0 %v81
    %v83 = vpop.xlane.xlu0 %82
    %v84 = vsel %vm54, %v80, 0.0
    %85 = vadd.xlane.f32.xlu0 %v84
    %v86 = vpop.xlane.xlu0 %85
    %v87 = vsel %vm54, %v83, 0.0
    %v88 = vrot.slane %v87, 4
    %v89 = vadd.f32 %v87, %v88
    %v90 = vrot.slane %v89, 2
    %v91 = vadd.f32 %v89, %v90
    %v92 = vrot.slane %v91, 1
    %v93 = vadd.f32 %v91, %v92
    %v94 = vsel %vm54, %v86, 0.0
    %v95 = vrot.slane %v94, 4
    %v96 = vadd.f32 %v94, %v95
    %v97 = vrot.slane %v96, 2
    %v98 = vadd.f32 %v96, %v97
    %v99 = vrot.slane %v98, 1
    %v100 = vadd.f32 %v98, %v99
    %v101 = vmul.f32 %v93, 0.001953125
    %v102 = vmul.f32 %v100, 0.001953125
    %v103 = vadd.f32 %v101, 1e-05
    %v104 = vadd.f32 %v102, 1e-05
    %v105 = vrsqrt.pop %v103
    %v106 = vrsqrt.pop %v104
    %v107 = vld [vmem:[#allocation5] sm:$0xf]
    %v108 = vld [vmem:[#allocation7] sm:$0xf]
    %v109 = vmul.f32 %v77, %v105
    %v110 = vmul.f32 %v78, %v106
    %v111 = vmul.f32 %v109, %v107
    %v112 = vmul.f32 %v110, %v107
    %v113 = vadd.f32 %v111, %v108
    %v114 = vadd.f32 %v112, %v108
    %115 = vst [vmem:[#allocation8] sm:$0xf] %v113
    %116 = vst [vmem:[#allocation8 + $0x4] sm:$0xf] %v114
    // Predicated region
    $region26: #{tpu_custom_call.1} parent=1 // pred_check
      _
    $region27: #{tpu_custom_call.1} parent=1 // pred_check_branch
      %118 = sbr.rel (0) target = $region29
    $region28: #{tpu_custom_call.1} parent=1 // pred_region
      %s120 = ssub.s32 128, 128
      %121 = vsyncadd [#allocation4], %s120
      %s122 = sshll.u32 [#allocation8], 4
      %s123 = int_to_ptr.vmem [resolvable:$true] %s122
      %128 = dma.vmem_to_hbm [thread:$0]  %s123, 128, %s3, [#allocation4], 64, 64, 4
    $region29: #{tpu_custom_call.1} parent=1 // pred_fallthru
      _
    // Predicated region
    $region30: #{tpu_custom_call.1} parent=1 // pred_check
      _
    $region31: #{tpu_custom_call.1} parent=1 // pred_check_branch
      %130 = sbr.rel (0) target = $region33
    $region32: #{tpu_custom_call.1} parent=1 // pred_region
      %131 = dma.done [#allocation4], 128
    $region33: #{tpu_custom_call.1} parent=1 // pred_fallthru
      _
    %132 = vsyncpa [#allocation3], 1
    %133 = vsyncpa [#allocation6], 1
    %134 = vsyncpa [#allocation4], 1

</llo_original>
